<compile_context>
chip_gen: v6e
topology: v6e:2x2x1
jax: 0.10.0
libtpu: 0.0.40
codegen_flags: <defaults>
</compile_context>

<pallas_src>
import functools

import jax
import jax.numpy as jnp
from jax.experimental import pallas as pl
from jax.experimental.pallas import tpu as pltpu

_LANE = 128
_NEG_PAD = -1e30  # finite bias padding for fake output columns: exp() underflows to 0


def _round_up(n, m):
    return ((n + m - 1) // m) * m


def _pick_batch_tile(B, block_b):
    """Pick the per-grid-step batch tile and the padded batch (pure-Python, static)."""
    B8 = _round_up(B, 8)          # sublane granularity
    bb = min(block_b, B8)
    # v7x: the "parallel" grid axis is sharded across the 2 TensorCores; once the
    # batch is big enough make sure there are at least 2 grid steps so neither core
    # idles.  On single-TC v5e/v6e this just halves the tile (still >= 256 rows,
    # near the HBM roofline).
    if B8 >= 512 and bb >= B8:
        bb = _round_up(B8 // 2, 8)
    # Tail-padding guard: shrink the tile until dead padded rows are <= 1/8 of the
    # batch (avoids DMA-ing up to ~1000 garbage rows on awkward batch sizes).
    while bb > 256 and (_round_up(B8, bb) - B8) * 8 > B8:
        bb //= 2
    bb = max(8, min(bb, B8))
    return bb, _round_up(B8, bb)


def _mlp_kernel(x_ref, w1_ref, b1_ref, w2_ref, b2_ref, w3_ref, b3_ref, o_ref):
    # 3 MXU matmuls (bf16 operands, f32 accumulation) + VPU relu + f32 log_softmax.
    # Weights/biases have constant index_maps -> resident in VMEM across the grid.
    x = x_ref[...].astype(jnp.bfloat16)   # no-op when the wrapper already fed bf16

    h1 = jnp.dot(x, w1_ref[...], preferred_element_type=jnp.float32) + b1_ref[...]
    h1 = jnp.maximum(h1, 0.0)

    h2 = jnp.dot(h1.astype(jnp.bfloat16), w2_ref[...],
                 preferred_element_type=jnp.float32) + b2_ref[...]
    h2 = jnp.maximum(h2, 0.0)

    logits = jnp.dot(h2.astype(jnp.bfloat16), w3_ref[...],
                     preferred_element_type=jnp.float32) + b3_ref[...]

    # Numerically-stable log_softmax over the last dim (all f32).  Padded columns
    # carry a finite -1e30 bias: they never win the max and exp() underflows to 0.
    m = jnp.max(logits, axis=-1, keepdims=True)
    shifted = logits - m
    lse = jnp.log(jnp.sum(jnp.exp(shifted), axis=-1, keepdims=True))
    o_ref[...] = (shifted - lse).astype(o_ref.dtype)


@functools.partial(jax.jit, static_argnames=("block_b",))
def t_model_forward(x, params, block_b=1024):
    """x: [B, 1, 28, 28] (NCHW).  Returns log-probs [B, 10] (float32)."""
    w1, b1, w2, b2, w3, b3 = params
    B = x.shape[0]
    xf = x.reshape(B, -1)                 # [B, 784]
    if xf.dtype != jnp.bfloat16:
        xf = xf.astype(jnp.float32)       # no-op for f32 inputs

    d_in, d_h1 = w1.shape
    d_h2 = w2.shape[1]
    d_out = w3.shape[1]
    d_out_pad = _round_up(d_out, _LANE)   # lane-dense output width (128)

    bb, B_pad = _pick_batch_tile(B, block_b)
    if B_pad != B:
        # Padding is required anyway: fuse the f32->bf16 cast into the same copy
        # (single HBM pass) so the kernel's dominant x DMA is halved.
        xf = jnp.pad(xf.astype(jnp.bfloat16), ((0, B_pad - B), (0, 0)))
    # else: deliberately NO standalone wrapper-side bf16 cast (extra un-fused HBM
    # pass: read f32 + write bf16 + read bf16 > read f32); kernel casts per-tile.

    # bf16 MXU operands for the (tiny, VMEM-resident) weights; biases stay f32.
    w1b = w1.astype(jnp.bfloat16)
    w2b = w2.astype(jnp.bfloat16)
    w3b = jnp.pad(w3, ((0, 0), (0, d_out_pad - d_out))).astype(jnp.bfloat16)
    b3p = jnp.pad(b3, ((0, 0), (0, d_out_pad - d_out)), constant_values=_NEG_PAD)

    grid = (B_pad // bb,)

    x_bytes = B_pad * d_in * jnp.dtype(xf.dtype).itemsize
    flops = 2 * B_pad * (d_in * d_h1 + d_h1 * d_h2 + d_h2 * d_out_pad)
    transcendentals = B_pad * d_out_pad + B_pad     # exp + log per row
    bytes_accessed = (
        x_bytes
        + (d_in * d_h1 + d_h1 * d_h2 + d_h2 * d_out_pad) * 2   # bf16 weights
        + (d_h1 + d_h2 + d_out_pad) * 4                        # f32 biases
        + B_pad * d_out_pad * 4                                # f32 output
    )

    out = pl.pallas_call(
        _mlp_kernel,
        out_shape=jax.ShapeDtypeStruct((B_pad, d_out_pad), jnp.float32),
        grid_spec=pltpu.PrefetchScalarGridSpec(
            num_scalar_prefetch=0,
            grid=grid,
            in_specs=[
                # x: tiled along the batch (the only axis that moves with the grid).
                pl.BlockSpec((bb, d_in), lambda i: (i, 0)),
                # Weights/biases: constant index_map -> resident in VMEM across grid.
                pl.BlockSpec((d_in, d_h1), lambda i: (0, 0)),
                pl.BlockSpec((1, d_h1), lambda i: (0, 0)),
                pl.BlockSpec((d_h1, d_h2), lambda i: (0, 0)),
                pl.BlockSpec((1, d_h2), lambda i: (0, 0)),
                pl.BlockSpec((d_h2, d_out_pad), lambda i: (0, 0)),
                pl.BlockSpec((1, d_out_pad), lambda i: (0, 0)),
            ],
            out_specs=pl.BlockSpec((bb, d_out_pad), lambda i: (i, 0)),
        ),
        compiler_params=pltpu.CompilerParams(
            dimension_semantics=("parallel",),
        ),
        cost_estimate=pl.CostEstimate(
            flops=flops,
            transcendentals=transcendentals,
            bytes_accessed=bytes_accessed,
        ),
    )(xf, w1b, b1, w2b, b2, w3b, b3p)

    return out[:B, :d_out]


def init_params(key):
    """Deterministic init mimicking nn.Linear default (uniform(-1/sqrt(fan_in), ...))."""
    dims = [(784, 200), (200, 50), (50, 10)]
    params = []
    for fan_in, fan_out in dims:
        kw, kb, key = jax.random.split(key, 3)
        bound = 1.0 / jnp.sqrt(float(fan_in))
        w = jax.random.uniform(kw, (fan_in, fan_out), jnp.float32, -bound, bound)
        b = jax.random.uniform(kb, (1, fan_out), jnp.float32, -bound, bound)
        params += [w, b]
    return tuple(params)


def _reference(x, params):
    """Pure f32 JAX reference (same math as the PyTorch module)."""
    w1, b1, w2, b2, w3, b3 = params
    xf = x.reshape(x.shape[0], -1)
    h1 = jax.nn.relu(xf @ w1 + b1)
    h2 = jax.nn.relu(h1 @ w2 + b2)
    logits = h2 @ w3 + b3
    return jax.nn.log_softmax(logits, axis=1)


def _check(x, params, block_b=1024):
    out = jax.block_until_ready(t_model_forward(x, params, block_b=block_b))
    ref = _reference(x, params)
    assert out.shape == (x.shape[0], 10)
    # bf16 MXU operands vs f32 reference -> loose-but-safe tolerance.
    assert jnp.allclose(out, ref, atol=2e-2, rtol=2e-2), "mismatch vs JAX reference"
    # Valid log-probabilities: rows exponentiate to ~1 (softmax math is f32 in-kernel).
    assert jnp.allclose(jnp.exp(out).sum(axis=1), 1.0, atol=1e-4), "rows not normalized"
    return out


if __name__ == "__main__":
    key = jax.random.PRNGKey(0)
    kx1, kx2, kp = jax.random.split(key, 3)
    params = init_params(kp)

    # Tiny batch: no padding needed -> f32 x path, grid=(1,) with one [8, 784] block.
    x_small = jax.random.normal(kx1, (8, 1, 28, 28), dtype=jnp.float32)
    _check(x_small, params)

    # Non-multiple-of-8 batch: exercises the padded / fused-bf16-x path.
    x_mid = jax.random.normal(kx2, (300, 1, 28, 28), dtype=jnp.float32)
    _check(x_mid, params)

    # Same batch with a small forced tile: exercises a multi-step grid with the
    # weights staying resident in VMEM across grid iterations.
    _check(x_mid, params, block_b=128)

    print("KERNEL_OK")
</pallas_src>

<mosaic_0001>
module attributes {stable_mosaic.version = 11 : i64} {
  func.func @_mlp_kernel(%arg0: i32, %arg1: memref<8x784xf32, #tpu.memory_space<vmem>>, %arg2: memref<784x200xbf16, #tpu.memory_space<vmem>>, %arg3: memref<1x200xf32, #tpu.memory_space<vmem>>, %arg4: memref<200x50xbf16, #tpu.memory_space<vmem>>, %arg5: memref<1x50xf32, #tpu.memory_space<vmem>>, %arg6: memref<50x128xbf16, #tpu.memory_space<vmem>>, %arg7: memref<1x128xf32, #tpu.memory_space<vmem>>, %arg8: memref<8x128xf32, #tpu.memory_space<vmem>>) attributes {dimension_semantics = [#tpu.dimension_semantics<parallel>], iteration_bounds = array<i64: 1>, scalar_prefetch = 0 : i64, scratch_operands = 0 : i64, tpu.core_type = #tpu.core_type<tc>, window_params = [{transform_indices = @transform_0, window_bounds = array<i64: 8, 784>}, {pipeline_mode = #tpu.pipeline_mode<synchronous>, transform_indices = @transform_1, window_bounds = array<i64: 784, 200>}, {pipeline_mode = #tpu.pipeline_mode<synchronous>, transform_indices = @transform_2, window_bounds = array<i64: 1, 200>}, {pipeline_mode = #tpu.pipeline_mode<synchronous>, transform_indices = @transform_3, window_bounds = array<i64: 200, 50>}, {pipeline_mode = #tpu.pipeline_mode<synchronous>, transform_indices = @transform_4, window_bounds = array<i64: 1, 50>}, {pipeline_mode = #tpu.pipeline_mode<synchronous>, transform_indices = @transform_5, window_bounds = array<i64: 50, 128>}, {pipeline_mode = #tpu.pipeline_mode<synchronous>, transform_indices = @transform_6, window_bounds = array<i64: 1, 128>}, {transform_indices = @transform_7, window_bounds = array<i64: 8, 128>}]} {
    %c0 = arith.constant 0 : index
    %c0_0 = arith.constant 0 : index
    %0 = vector.load %arg1[%c0, %c0_0] : memref<8x784xf32, #tpu.memory_space<vmem>>, vector<8x784xf32>
    %1 = arith.truncf %0 : vector<8x784xf32> to vector<8x784xbf16>
    %c0_1 = arith.constant 0 : index
    %c0_2 = arith.constant 0 : index
    %2 = vector.load %arg2[%c0_1, %c0_2] : memref<784x200xbf16, #tpu.memory_space<vmem>>, vector<784x200xbf16>
    %cst = arith.constant dense<0.000000e+00> : vector<8x200xf32>
    %3 = tpu.matmul %1, %2, %cst {dimension_numbers = #tpu.dot_dimension_numbers<[1], [0], [0], [1], [0, 0, 1, 1], [], []>} : vector<8x784xbf16>, vector<784x200xbf16>, vector<8x200xf32> -> vector<8x200xf32>
    %c0_3 = arith.constant 0 : index
    %c0_4 = arith.constant 0 : index
    %4 = vector.load %arg3[%c0_3, %c0_4] : memref<1x200xf32, #tpu.memory_space<vmem>>, vector<1x200xf32>
    %5 = vector.broadcast %4 : vector<1x200xf32> to vector<8x200xf32>
    %6 = arith.addf %3, %5 : vector<8x200xf32>
    %cst_5 = arith.constant 0.000000e+00 : f32
    %7 = vector.broadcast %cst_5 : f32 to vector<8x200xf32>
    %8 = arith.maximumf %6, %7 : vector<8x200xf32>
    %9 = arith.truncf %8 : vector<8x200xf32> to vector<8x200xbf16>
    %c0_6 = arith.constant 0 : index
    %c0_7 = arith.constant 0 : index
    %10 = vector.load %arg4[%c0_6, %c0_7] : memref<200x50xbf16, #tpu.memory_space<vmem>>, vector<200x50xbf16>
    %cst_8 = arith.constant dense<0.000000e+00> : vector<8x50xf32>
    %11 = tpu.matmul %9, %10, %cst_8 {dimension_numbers = #tpu.dot_dimension_numbers<[1], [0], [0], [1], [0, 0, 1, 1], [], []>} : vector<8x200xbf16>, vector<200x50xbf16>, vector<8x50xf32> -> vector<8x50xf32>
    %c0_9 = arith.constant 0 : index
    %c0_10 = arith.constant 0 : index
    %12 = vector.load %arg5[%c0_9, %c0_10] : memref<1x50xf32, #tpu.memory_space<vmem>>, vector<1x50xf32>
    %13 = vector.broadcast %12 : vector<1x50xf32> to vector<8x50xf32>
    %14 = arith.addf %11, %13 : vector<8x50xf32>
    %cst_11 = arith.constant 0.000000e+00 : f32
    %15 = vector.broadcast %cst_11 : f32 to vector<8x50xf32>
    %16 = arith.maximumf %14, %15 : vector<8x50xf32>
    %17 = arith.truncf %16 : vector<8x50xf32> to vector<8x50xbf16>
    %c0_12 = arith.constant 0 : index
    %c0_13 = arith.constant 0 : index
    %18 = vector.load %arg6[%c0_12, %c0_13] : memref<50x128xbf16, #tpu.memory_space<vmem>>, vector<50x128xbf16>
    %cst_14 = arith.constant dense<0.000000e+00> : vector<8x128xf32>
    %19 = tpu.matmul %17, %18, %cst_14 {dimension_numbers = #tpu.dot_dimension_numbers<[1], [0], [0], [1], [0, 0, 1, 1], [], []>} : vector<8x50xbf16>, vector<50x128xbf16>, vector<8x128xf32> -> vector<8x128xf32>
    %c0_15 = arith.constant 0 : index
    %c0_16 = arith.constant 0 : index
    %20 = vector.load %arg7[%c0_15, %c0_16] : memref<1x128xf32, #tpu.memory_space<vmem>>, vector<1x128xf32>
    %21 = vector.broadcast %20 : vector<1x128xf32> to vector<8x128xf32>
    %22 = arith.addf %19, %21 : vector<8x128xf32>
    %cst_17 = arith.constant dense<0xFF800000> : vector<8xf32>
    %23 = vector.multi_reduction <maximumf>, %22, %cst_17 [1] : vector<8x128xf32> to vector<8xf32>
    %24 = vector.shape_cast %23 : vector<8xf32> to vector<8x1xf32>
    %25 = vector.broadcast %24 : vector<8x1xf32> to vector<8x128xf32>
    %26 = arith.subf %22, %25 : vector<8x128xf32>
    %27 = math.exp %26 : vector<8x128xf32>
    %cst_18 = arith.constant dense<0.000000e+00> : vector<8xf32>
    %28 = vector.multi_reduction <add>, %27, %cst_18 [1] : vector<8x128xf32> to vector<8xf32>
    %29 = vector.shape_cast %28 : vector<8xf32> to vector<8x1xf32>
    %30 = math.log %29 : vector<8x1xf32>
    %31 = vector.broadcast %30 : vector<8x1xf32> to vector<8x128xf32>
    %32 = arith.subf %26, %31 : vector<8x128xf32>
    %c0_19 = arith.constant 0 : index
    %c0_20 = arith.constant 0 : index
    %33 = vector.load %arg8[%c0_19, %c0_20] : memref<8x128xf32, #tpu.memory_space<vmem>>, vector<8x128xf32>
    tpu.vector_store %arg8[%c0_19, %c0_20], %32 {strides = array<i32>} : memref<8x128xf32, #tpu.memory_space<vmem>>, vector<8x128xf32>,
    return
  }
  func.func @transform_0(%arg0: i32) -> (i32, i32) {
    %c0_i32 = arith.constant 0 : i32
    %c0_i32_0 = arith.constant 0 : i32
    return %arg0, %c0_i32 : i32, i32
  }
  func.func @transform_1(%arg0: i32) -> (i32, i32) {
    %c0_i32 = arith.constant 0 : i32
    %c0_i32_0 = arith.constant 0 : i32
    %c0_i32_1 = arith.constant 0 : i32
    return %c0_i32, %c0_i32_0 : i32, i32
  }
  func.func @transform_2(%arg0: i32) -> (i32, i32) {
    %c0_i32 = arith.constant 0 : i32
    %c0_i32_0 = arith.constant 0 : i32
    %c0_i32_1 = arith.constant 0 : i32
    return %c0_i32, %c0_i32_0 : i32, i32
  }
  func.func @transform_3(%arg0: i32) -> (i32, i32) {
    %c0_i32 = arith.constant 0 : i32
    %c0_i32_0 = arith.constant 0 : i32
    %c0_i32_1 = arith.constant 0 : i32
    return %c0_i32, %c0_i32_0 : i32, i32
  }
  func.func @transform_4(%arg0: i32) -> (i32, i32) {
    %c0_i32 = arith.constant 0 : i32
    %c0_i32_0 = arith.constant 0 : i32
    %c0_i32_1 = arith.constant 0 : i32
    return %c0_i32, %c0_i32_0 : i32, i32
  }
  func.func @transform_5(%arg0: i32) -> (i32, i32) {
    %c0_i32 = arith.constant 0 : i32
    %c0_i32_0 = arith.constant 0 : i32
    %c0_i32_1 = arith.constant 0 : i32
    return %c0_i32, %c0_i32_0 : i32, i32
  }
  func.func @transform_6(%arg0: i32) -> (i32, i32) {
    %c0_i32 = arith.constant 0 : i32
    %c0_i32_0 = arith.constant 0 : i32
    %c0_i32_1 = arith.constant 0 : i32
    return %c0_i32, %c0_i32_0 : i32, i32
  }
  func.func @transform_7(%arg0: i32) -> (i32, i32) {
    %c0_i32 = arith.constant 0 : i32
    %c0_i32_0 = arith.constant 0 : i32
    return %arg0, %c0_i32 : i32, i32
  }
}

</mosaic_0001>

<llo_original>
// kernel: t_model_forward.1
$region0: #{t_model_forward.1}
  #allocation0 [shape = 'u32[]', space=smem, size = 0x4, offset = 0x4, fixed_abs, tag = 'smem constant byte address 0x4 - core index']
  #allocation1 [shape = 'u32[144,128]{1,0:T(1,128)}', space=vmem, size = 0x12000, scoped, tag = 'internal scratch']
  %s0 = inlined_call_operand.vmem [shape: f32[8,784], index: 0, kind: input, shape index: {}]
  %s1 = inlined_call_operand.vmem [shape: bf16[784,200], index: 1, kind: input, shape index: {}]
  %s2 = inlined_call_operand.vmem [shape: f32[1,200], index: 2, kind: input, shape index: {}]
  %s3 = inlined_call_operand.vmem [shape: bf16[200,50], index: 3, kind: input, shape index: {}]
  %s4 = inlined_call_operand.vmem [shape: f32[1,50], index: 4, kind: input, shape index: {}]
  %s5 = inlined_call_operand.vmem [shape: bf16[50,128], index: 5, kind: input, shape index: {}]
  %s6 = inlined_call_operand.vmem [shape: f32[1,128], index: 6, kind: input, shape index: {}]
  %s7 = inlined_call_operand.hbm [shape: f32[8,128], index: 7, kind: output, shape index: {}]
  %s8 = sld [smem:[#allocation0]]
  $region38: #{t_model_forward.1} parent=0
    _
  %s10 = ssub.s32 1, %s8
  %s11 = scalar_select 0, %s10, %s8
  $region1: #{t_model_forward.1} parent=0
    #allocation2 [shape = 'u8[4096]{0}', space=vmem, size = 0x1000, scoped, tag = 'output window, operand 0, single buffered']
    #allocation3 [shape = 's32[1]{0}', space=sflag, size = 0x4, scoped, tag = 'scoped memory for t_model_forward.1']
    %12 = vsyncpa [#allocation3], 0
    // Predicated region
    $region2: #{t_model_forward.1} parent=1 // pred_check
      _
    $region3: #{t_model_forward.1} parent=1 // pred_check_branch
      %14 = sbr.rel (0) target = $region5
    $region4: #{t_model_forward.1} parent=1 // pred_region
      _
    $region5: #{t_model_forward.1} parent=1 // pred_fallthru
      _
    // Predicated region
    $region6: #{t_model_forward.1} parent=1 // pred_check
      _
    $region7: #{t_model_forward.1} parent=1 // pred_check_branch
      %16 = sbr.rel (0) target = $region9
    $region8: #{t_model_forward.1} parent=1 // pred_region
      _
    $region9: #{t_model_forward.1} parent=1 // pred_fallthru
      _
    // Predicated region
    $region10: #{t_model_forward.1} parent=1 // pred_check
      _
    $region11: #{t_model_forward.1} parent=1 // pred_check_branch
      %18 = sbr.rel (0) target = $region13
    $region12: #{t_model_forward.1} parent=1 // pred_region
      _
    $region13: #{t_model_forward.1} parent=1 // pred_fallthru
      _
    // Predicated region
    $region14: #{t_model_forward.1} parent=1 // pred_check
      _
    $region15: #{t_model_forward.1} parent=1 // pred_check_branch
      %20 = sbr.rel (0) target = $region17
    $region16: #{t_model_forward.1} parent=1 // pred_region
      _
    $region17: #{t_model_forward.1} parent=1 // pred_fallthru
      _
    // Predicated region
    $region18: #{t_model_forward.1} parent=1 // pred_check
      _
    $region19: #{t_model_forward.1} parent=1 // pred_check_branch
      %22 = sbr.rel (0) target = $region21
    $region20: #{t_model_forward.1} parent=1 // pred_region
      _
    $region21: #{t_model_forward.1} parent=1 // pred_fallthru
      _
    // Predicated region
    $region22: #{t_model_forward.1} parent=1 // pred_check
      _
    $region23: #{t_model_forward.1} parent=1 // pred_check_branch
      %24 = sbr.rel (0) target = $region25
    $region24: #{t_model_forward.1} parent=1 // pred_region
      _
    $region25: #{t_model_forward.1} parent=1 // pred_fallthru
      _
    // Predicated region
    $region26: #{t_model_forward.1} parent=1 // pred_check
      _
    $region27: #{t_model_forward.1} parent=1 // pred_check_branch
      %26 = sbr.rel (0) target = $region29
    $region28: #{t_model_forward.1} parent=1 // pred_region
      _
    $region29: #{t_model_forward.1} parent=1 // pred_fallthru
      _
    %v28 = vld [vmem:[%s0] sm:$0xff]
    %v29 = vld [vmem:[%s0 + $0x8] sm:$0xff]
    %v30 = vld [vmem:[%s0 + $0x10] sm:$0xff]
    %v31 = vld [vmem:[%s0 + $0x18] sm:$0xff]
    %v32 = vld [vmem:[%s0 + $0x20] sm:$0xff]
    %v33 = vld [vmem:[%s0 + $0x28] sm:$0xff]
    %v34 = vld [vmem:[%s0 + $0x30] sm:$0xff]
    %v35 = vpack.c.bf16 %v28, %v28
    %v36 = vpack.c.bf16 %v29, %v29
    %v37 = vpack.c.bf16 %v30, %v30
    %v38 = vpack.c.bf16 %v31, %v31
    %v39 = vpack.c.bf16 %v32, %v32
    %v40 = vpack.c.bf16 %v33, %v33
    %v41 = vpack.c.bf16 %v34, %v34
    %v42 = vld [vmem:[%s1] sm:$0xff]
    %v43 = vld [vmem:[%s1 + $0x8] sm:$0xff]
    %v44 = vld [vmem:[%s1 + $0x10] sm:$0xff]
    %v45 = vld [vmem:[%s1 + $0x18] sm:$0xff]
    %v46 = vld [vmem:[%s1 + $0x20] sm:$0xff]
    %v47 = vld [vmem:[%s1 + $0x28] sm:$0xff]
    %v48 = vld [vmem:[%s1 + $0x30] sm:$0xff]
    %v49 = vld [vmem:[%s1 + $0x38] sm:$0xff]
    %v50 = vld [vmem:[%s1 + $0x40] sm:$0xff]
    %v51 = vld [vmem:[%s1 + $0x48] sm:$0xff]
    %v52 = vld [vmem:[%s1 + $0x50] sm:$0xff]
    %v53 = vld [vmem:[%s1 + $0x58] sm:$0xff]
    %v54 = vld [vmem:[%s1 + $0x60] sm:$0xff]
    %v55 = vld [vmem:[%s1 + $0x68] sm:$0xff]
    %v56 = vld [vmem:[%s1 + $0x70] sm:$0xff]
    %v57 = vld [vmem:[%s1 + $0x78] sm:$0xff]
    %v58 = vld [vmem:[%s1 + $0x80] sm:$0xff]
    %v59 = vld [vmem:[%s1 + $0x88] sm:$0xff]
    %v60 = vld [vmem:[%s1 + $0x90] sm:$0xff]
    %v61 = vld [vmem:[%s1 + $0x98] sm:$0xff]
    %v62 = vld [vmem:[%s1 + $0xa0] sm:$0xff]
    %v63 = vld [vmem:[%s1 + $0xa8] sm:$0xff]
    %v64 = vld [vmem:[%s1 + $0xb0] sm:$0xff]
    %v65 = vld [vmem:[%s1 + $0xb8] sm:$0xff]
    %v66 = vld [vmem:[%s1 + $0xc0] sm:$0xff]
    %v67 = vld [vmem:[%s1 + $0xc8] sm:$0xff]
    %v68 = vld [vmem:[%s1 + $0xd0] sm:$0xff]
    %v69 = vld [vmem:[%s1 + $0xd8] sm:$0xff]
    %v70 = vld [vmem:[%s1 + $0xe0] sm:$0xff]
    %v71 = vld [vmem:[%s1 + $0xe8] sm:$0xff]
    %v72 = vld [vmem:[%s1 + $0xf0] sm:$0xff]
    %v73 = vld [vmem:[%s1 + $0xf8] sm:$0xff]
    %v74 = vld [vmem:[%s1 + $0x100] sm:$0xff]
    %v75 = vld [vmem:[%s1 + $0x108] sm:$0xff]
    %v76 = vld [vmem:[%s1 + $0x110] sm:$0xff]
    %v77 = vld [vmem:[%s1 + $0x118] sm:$0xff]
    %v78 = vld [vmem:[%s1 + $0x120] sm:$0xff]
    %v79 = vld [vmem:[%s1 + $0x128] sm:$0xff]
    %v80 = vld [vmem:[%s1 + $0x130] sm:$0xff]
    %v81 = vld [vmem:[%s1 + $0x138] sm:$0xff]
    %v82 = vld [vmem:[%s1 + $0x140] sm:$0xff]
    %v83 = vld [vmem:[%s1 + $0x148] sm:$0xff]
    %v84 = vld [vmem:[%s1 + $0x150] sm:$0xff]
    %v85 = vld [vmem:[%s1 + $0x158] sm:$0xff]
    %v86 = vld [vmem:[%s1 + $0x160] sm:$0xff]
    %v87 = vld [vmem:[%s1 + $0x168] sm:$0xff]
    %v88 = vld [vmem:[%s1 + $0x170] sm:$0xff]
    %v89 = vld [vmem:[%s1 + $0x178] sm:$0xff]
    %v90 = vld [vmem:[%s1 + $0x180] sm:$0xff]
    %v91 = vld [vmem:[%s1 + $0x188] sm:$0xff]
    %v92 = vld [vmem:[%s1 + $0x190] sm:$0xff]
    %v93 = vld [vmem:[%s1 + $0x198] sm:$0xff]
    %v94 = vld [vmem:[%s1 + $0x1a0] sm:$0xff]
    %v95 = vld [vmem:[%s1 + $0x1a8] sm:$0xff]
    %v96 = vld [vmem:[%s1 + $0x1b0] sm:$0xff]
    %v97 = vld [vmem:[%s1 + $0x1b8] sm:$0xff]
    %v98 = vld [vmem:[%s1 + $0x1c0] sm:$0xff]
    %v99 = vld [vmem:[%s1 + $0x1c8] sm:$0xff]
    %v100 = vld [vmem:[%s1 + $0x1d0] sm:$0xff]
    %v101 = vld [vmem:[%s1 + $0x1d8] sm:$0xff]
    %v102 = vld [vmem:[%s1 + $0x1e0] sm:$0xff]
    %v103 = vld [vmem:[%s1 + $0x1e8] sm:$0xff]
    %v104 = vld [vmem:[%s1 + $0x1f0] sm:$0xff]
    %v105 = vld [vmem:[%s1 + $0x1f8] sm:$0xff]
    %v106 = vld [vmem:[%s1 + $0x200] sm:$0xff]
    %v107 = vld [vmem:[%s1 + $0x208] sm:$0xff]
    %v108 = vld [vmem:[%s1 + $0x210] sm:$0xff]
    %v109 = vld [vmem:[%s1 + $0x218] sm:$0xff]
    %v110 = vld [vmem:[%s1 + $0x220] sm:$0xff]
    %v111 = vld [vmem:[%s1 + $0x228] sm:$0xff]
    %v112 = vld [vmem:[%s1 + $0x230] sm:$0xff]
    %v113 = vld [vmem:[%s1 + $0x238] sm:$0xff]
    %v114 = vld [vmem:[%s1 + $0x240] sm:$0xff]
    %v115 = vld [vmem:[%s1 + $0x248] sm:$0xff]
    %v116 = vld [vmem:[%s1 + $0x250] sm:$0xff]
    %v117 = vld [vmem:[%s1 + $0x258] sm:$0xff]
    %v118 = vld [vmem:[%s1 + $0x260] sm:$0xff]
    %v119 = vld [vmem:[%s1 + $0x268] sm:$0xff]
    %v120 = vld [vmem:[%s1 + $0x270] sm:$0xff]
    %v121 = vld [vmem:[%s1 + $0x278] sm:$0xff]
    %v122 = vld [vmem:[%s1 + $0x280] sm:$0xff]
    %v123 = vld [vmem:[%s1 + $0x288] sm:$0xff]
    %v124 = vld [vmem:[%s1 + $0x290] sm:$0xff]
    %v125 = vld [vmem:[%s1 + $0x298] sm:$0xff]
    %v126 = vld [vmem:[%s1 + $0x2a0] sm:$0xff]
    %v127 = vld [vmem:[%s1 + $0x2a8] sm:$0xff]
    %v128 = vld [vmem:[%s1 + $0x2b0] sm:$0xff]
    %v129 = vld [vmem:[%s1 + $0x2b8] sm:$0xff]
    %v130 = vld [vmem:[%s1 + $0x2c0] sm:$0xff]
    %v131 = vld [vmem:[%s1 + $0x2c8] sm:$0xff]
    %v132 = vld [vmem:[%s1 + $0x2d0] sm:$0xff]
    %v133 = vld [vmem:[%s1 + $0x2d8] sm:$0xff]
    %v134 = vld [vmem:[%s1 + $0x2e0] sm:$0xff]
    %v135 = vld [vmem:[%s1 + $0x2e8] sm:$0xff]
    %v136 = vld [vmem:[%s1 + $0x2f0] sm:$0xff]
    %v137 = vld [vmem:[%s1 + $0x2f8] sm:$0xff]
    %v138 = vld [vmem:[%s1 + $0x300] sm:$0xff]
    %v139 = vld [vmem:[%s1 + $0x308] sm:$0xff]
    %v140 = vld [vmem:[%s2] sm:$0x3]
    %v142 = vlaneseq
    %v143 = vshrl.u32 %v142, 7
    %v144 = vsub.s32 0, %v143
    %v145 = vrot.slane %v140, %v144
    %v146 = vlaneseq
    %v147 = vshrl.u32 %v146, 7
    %v148 = vsub.s32 1, %v147
    %v149 = vrot.slane %v140, %v148
    %v250 = vunpack.c.l.b16 %v42
    %v251 = vunpack.c.h.b16 %v42
    %v252 = vunpack.c.l.b16 %v43
    %v253 = vunpack.c.h.b16 %v43
    %v254 = vunpack.c.l.b16 %v44
    %v255 = vunpack.c.h.b16 %v44
    %v256 = vunpack.c.l.b16 %v45
    %v257 = vunpack.c.h.b16 %v45
    %v258 = vunpack.c.l.b16 %v46
    %v259 = vunpack.c.h.b16 %v46
    %v260 = vunpack.c.l.b16 %v47
    %v261 = vunpack.c.h.b16 %v47
    %v262 = vunpack.c.l.b16 %v48
    %v263 = vunpack.c.h.b16 %v48
    %v264 = vunpack.c.l.b16 %v49
    %v265 = vunpack.c.h.b16 %v49
    %v266 = vunpack.c.l.b16 %v50
    %v267 = vunpack.c.h.b16 %v50
    %v268 = vunpack.c.l.b16 %v51
    %v269 = vunpack.c.h.b16 %v51
    %v270 = vunpack.c.l.b16 %v52
    %v271 = vunpack.c.h.b16 %v52
    %v272 = vunpack.c.l.b16 %v53
    %v273 = vunpack.c.h.b16 %v53
    %v274 = vunpack.c.l.b16 %v54
    %v275 = vunpack.c.h.b16 %v54
    %v276 = vunpack.c.l.b16 %v55
    %v277 = vunpack.c.h.b16 %v55
    %v278 = vunpack.c.l.b16 %v56
    %v279 = vunpack.c.h.b16 %v56
    %v280 = vunpack.c.l.b16 %v57
    %v281 = vunpack.c.h.b16 %v57
    %v282 = vunpack.c.l.b16 %v58
    %v283 = vunpack.c.h.b16 %v58
    %v284 = vunpack.c.l.b16 %v59
    %v285 = vunpack.c.h.b16 %v59
    %v286 = vunpack.c.l.b16 %v60
    %v287 = vunpack.c.h.b16 %v60
    %v288 = vunpack.c.l.b16 %v61
    %v289 = vunpack.c.h.b16 %v61
    %v290 = vunpack.c.l.b16 %v62
    %v291 = vunpack.c.h.b16 %v62
    %v292 = vunpack.c.l.b16 %v63
    %v293 = vunpack.c.h.b16 %v63
    %v294 = vunpack.c.l.b16 %v64
    %v295 = vunpack.c.h.b16 %v64
    %v296 = vunpack.c.l.b16 %v65
    %v297 = vunpack.c.h.b16 %v65
    %v298 = vunpack.c.l.b16 %v66
    %v299 = vunpack.c.h.b16 %v66
    %v300 = vunpack.c.l.b16 %v67
    %v301 = vunpack.c.h.b16 %v67
    %v302 = vunpack.c.l.b16 %v68
    %v303 = vunpack.c.h.b16 %v68
    %v304 = vunpack.c.l.b16 %v69
    %v305 = vunpack.c.h.b16 %v69
    %v306 = vunpack.c.l.b16 %v70
    %v307 = vunpack.c.h.b16 %v70
    %v308 = vunpack.c.l.b16 %v71
    %v309 = vunpack.c.h.b16 %v71
    %v310 = vunpack.c.l.b16 %v72
    %v311 = vunpack.c.h.b16 %v72
    %v312 = vunpack.c.l.b16 %v73
    %v313 = vunpack.c.h.b16 %v73
    %v314 = vunpack.c.l.b16 %v74
    %v315 = vunpack.c.h.b16 %v74
    %v316 = vunpack.c.l.b16 %v75
    %v317 = vunpack.c.h.b16 %v75
    %v318 = vunpack.c.l.b16 %v76
    %v319 = vunpack.c.h.b16 %v76
    %v320 = vunpack.c.l.b16 %v77
    %v321 = vunpack.c.h.b16 %v77
    %v322 = vunpack.c.l.b16 %v78
    %v323 = vunpack.c.h.b16 %v78
    %v324 = vunpack.c.l.b16 %v79
    %v325 = vunpack.c.h.b16 %v79
    %v326 = vunpack.c.l.b16 %v80
    %v327 = vunpack.c.h.b16 %v80
    %v328 = vunpack.c.l.b16 %v81
    %v329 = vunpack.c.h.b16 %v81
    %v330 = vunpack.c.l.b16 %v82
    %v331 = vunpack.c.h.b16 %v82
    %v332 = vunpack.c.l.b16 %v83
    %v333 = vunpack.c.h.b16 %v83
    %v334 = vunpack.c.l.b16 %v84
    %v335 = vunpack.c.h.b16 %v84
    %v336 = vunpack.c.l.b16 %v85
    %v337 = vunpack.c.h.b16 %v85
    %v338 = vunpack.c.l.b16 %v86
    %v339 = vunpack.c.h.b16 %v86
    %v340 = vunpack.c.l.b16 %v87
    %v341 = vunpack.c.h.b16 %v87
    %v342 = vunpack.c.l.b16 %v88
    %v343 = vunpack.c.h.b16 %v88
    %v344 = vunpack.c.l.b16 %v89
    %v345 = vunpack.c.h.b16 %v89
    %v346 = vunpack.c.l.b16 %v90
    %v347 = vunpack.c.h.b16 %v90
    %v348 = vunpack.c.l.b16 %v91
    %v349 = vunpack.c.h.b16 %v91
    %v350 = vunpack.c.l.b16 %v92
    %v351 = vunpack.c.h.b16 %v92
    %v352 = vunpack.c.l.b16 %v93
    %v353 = vunpack.c.h.b16 %v93
    %v354 = vunpack.c.l.b16 %v94
    %v355 = vunpack.c.h.b16 %v94
    %v356 = vunpack.c.l.b16 %v95
    %v357 = vunpack.c.h.b16 %v95
    %v358 = vunpack.c.l.b16 %v96
    %v359 = vunpack.c.h.b16 %v96
    %v360 = vunpack.c.l.b16 %v97
    %v361 = vunpack.c.h.b16 %v97
    %v362 = vunpack.c.l.b16 %v98
    %v363 = vunpack.c.h.b16 %v98
    %v364 = vunpack.c.l.b16 %v99
    %v365 = vunpack.c.h.b16 %v99
    %v366 = vunpack.c.l.b16 %v100
    %v367 = vunpack.c.h.b16 %v100
    %v368 = vunpack.c.l.b16 %v101
    %v369 = vunpack.c.h.b16 %v101
    %v370 = vunpack.c.l.b16 %v102
    %v371 = vunpack.c.h.b16 %v102
    %v372 = vunpack.c.l.b16 %v103
    %v373 = vunpack.c.h.b16 %v103
    %v374 = vunpack.c.l.b16 %v104
    %v375 = vunpack.c.h.b16 %v104
    %v376 = vunpack.c.l.b16 %v105
    %v377 = vunpack.c.h.b16 %v105
    %v378 = vunpack.c.l.b16 %v106
    %v379 = vunpack.c.h.b16 %v106
    %v380 = vunpack.c.l.b16 %v107
    %v381 = vunpack.c.h.b16 %v107
    %v382 = vunpack.c.l.b16 %v108
    %v383 = vunpack.c.h.b16 %v108
    %v384 = vunpack.c.l.b16 %v109
    %v385 = vunpack.c.h.b16 %v109
    %v386 = vunpack.c.l.b16 %v110
    %v387 = vunpack.c.h.b16 %v110
    %v388 = vunpack.c.l.b16 %v111
    %v389 = vunpack.c.h.b16 %v111
    %v390 = vunpack.c.l.b16 %v112
    %v391 = vunpack.c.h.b16 %v112
    %v392 = vunpack.c.l.b16 %v113
    %v393 = vunpack.c.h.b16 %v113
    %v394 = vunpack.c.l.b16 %v114
    %v395 = vunpack.c.h.b16 %v114
    %v396 = vunpack.c.l.b16 %v115
    %v397 = vunpack.c.h.b16 %v115
    %v398 = vunpack.c.l.b16 %v116
    %v399 = vunpack.c.h.b16 %v116
    %v400 = vunpack.c.l.b16 %v117
    %v401 = vunpack.c.h.b16 %v117
    %v402 = vunpack.c.l.b16 %v118
    %v403 = vunpack.c.h.b16 %v118
    %v404 = vunpack.c.l.b16 %v119
    %v405 = vunpack.c.h.b16 %v119
    %v406 = vunpack.c.l.b16 %v120
    %v407 = vunpack.c.h.b16 %v120
    %v408 = vunpack.c.l.b16 %v121
    %v409 = vunpack.c.h.b16 %v121
    %v410 = vunpack.c.l.b16 %v122
    %v411 = vunpack.c.h.b16 %v122
    %v412 = vunpack.c.l.b16 %v123
    %v413 = vunpack.c.h.b16 %v123
    %v414 = vunpack.c.l.b16 %v124
    %v415 = vunpack.c.h.b16 %v124
    %v416 = vunpack.c.l.b16 %v125
    %v417 = vunpack.c.h.b16 %v125
    %v418 = vunpack.c.l.b16 %v126
    %v419 = vunpack.c.h.b16 %v126
    %v420 = vunpack.c.l.b16 %v127
    %v421 = vunpack.c.h.b16 %v127
    %v422 = vunpack.c.l.b16 %v128
    %v423 = vunpack.c.h.b16 %v128
    %v424 = vunpack.c.l.b16 %v129
    %v425 = vunpack.c.h.b16 %v129
    %v426 = vunpack.c.l.b16 %v130
    %v427 = vunpack.c.h.b16 %v130
    %v428 = vunpack.c.l.b16 %v131
    %v429 = vunpack.c.h.b16 %v131
    %v430 = vunpack.c.l.b16 %v132
    %v431 = vunpack.c.h.b16 %v132
    %v432 = vunpack.c.l.b16 %v133
    %v433 = vunpack.c.h.b16 %v133
    %v434 = vunpack.c.l.b16 %v134
    %v435 = vunpack.c.h.b16 %v134
    %v436 = vunpack.c.l.b16 %v135
    %v437 = vunpack.c.h.b16 %v135
    %v438 = vunpack.c.l.b16 %v136
    %v439 = vunpack.c.h.b16 %v136
    %v440 = vunpack.c.l.b16 %v137
    %v441 = vunpack.c.h.b16 %v137
    %v442 = vunpack.c.l.b16 %v138
    %v443 = vunpack.c.h.b16 %v138
    %v444 = vunpack.c.l.b16 %v139
    %v445 = vunpack.c.h.b16 %v139
    %v446 = vpack.c.b16 %v252, %v250
    %v447 = vpack.c.b16 %v253, %v251
    %v448 = vpack.c.b16 %v256, %v254
    %v449 = vpack.c.b16 %v257, %v255
    %v450 = vpack.c.b16 %v260, %v258
    %v451 = vpack.c.b16 %v261, %v259
    %v452 = vpack.c.b16 %v264, %v262
    %v453 = vpack.c.b16 %v265, %v263
    %v454 = vpack.c.b16 %v268, %v266
    %v455 = vpack.c.b16 %v269, %v267
    %v456 = vpack.c.b16 %v272, %v270
    %v457 = vpack.c.b16 %v273, %v271
    %v458 = vpack.c.b16 %v276, %v274
    %v459 = vpack.c.b16 %v277, %v275
    %v460 = vpack.c.b16 %v280, %v278
    %v461 = vpack.c.b16 %v281, %v279
    %v462 = vpack.c.b16 %v284, %v282
    %v463 = vpack.c.b16 %v285, %v283
    %v464 = vpack.c.b16 %v288, %v286
    %v465 = vpack.c.b16 %v289, %v287
    %v466 = vpack.c.b16 %v292, %v290
    %v467 = vpack.c.b16 %v293, %v291
    %v468 = vpack.c.b16 %v296, %v294
    %v469 = vpack.c.b16 %v297, %v295
    %v470 = vpack.c.b16 %v300, %v298
    %v471 = vpack.c.b16 %v301, %v299
    %v472 = vpack.c.b16 %v304, %v302
    %v473 = vpack.c.b16 %v305, %v303
    %v474 = vpack.c.b16 %v308, %v306
    %v475 = vpack.c.b16 %v309, %v307
    %v476 = vpack.c.b16 %v312, %v310
    %v477 = vpack.c.b16 %v313, %v311
    %v478 = vpack.c.b16 %v316, %v314
    %v479 = vpack.c.b16 %v317, %v315
    %v480 = vpack.c.b16 %v320, %v318
    %v481 = vpack.c.b16 %v321, %v319
    %v482 = vpack.c.b16 %v324, %v322
    %v483 = vpack.c.b16 %v325, %v323
    %v484 = vpack.c.b16 %v328, %v326
    %v485 = vpack.c.b16 %v329, %v327
    %v486 = vpack.c.b16 %v332, %v330
    %v487 = vpack.c.b16 %v333, %v331
    %v488 = vpack.c.b16 %v336, %v334
    %v489 = vpack.c.b16 %v337, %v335
    %v490 = vpack.c.b16 %v340, %v338
    %v491 = vpack.c.b16 %v341, %v339
    %v492 = vpack.c.b16 %v344, %v342
    %v493 = vpack.c.b16 %v345, %v343
    %v494 = vpack.c.b16 %v348, %v346
    %v495 = vpack.c.b16 %v349, %v347
    %v496 = vpack.c.b16 %v352, %v350
    %v497 = vpack.c.b16 %v353, %v351
    %v498 = vpack.c.b16 %v356, %v354
    %v499 = vpack.c.b16 %v357, %v355
    %v500 = vpack.c.b16 %v360, %v358
    %v501 = vpack.c.b16 %v361, %v359
    %v502 = vpack.c.b16 %v364, %v362
    %v503 = vpack.c.b16 %v365, %v363
    %v504 = vpack.c.b16 %v368, %v366
    %v505 = vpack.c.b16 %v369, %v367
    %v506 = vpack.c.b16 %v372, %v370
    %v507 = vpack.c.b16 %v373, %v371
    %v508 = vpack.c.b16 %v376, %v374
    %v509 = vpack.c.b16 %v377, %v375
    %v510 = vpack.c.b16 %v380, %v378
    %v511 = vpack.c.b16 %v381, %v379
    %v512 = vpack.c.b16 %v384, %v382
    %v513 = vpack.c.b16 %v385, %v383
    %v514 = vpack.c.b16 %v388, %v386
    %v515 = vpack.c.b16 %v389, %v387
    %v516 = vpack.c.b16 %v392, %v390
    %v517 = vpack.c.b16 %v393, %v391
    %v518 = vpack.c.b16 %v396, %v394
    %v519 = vpack.c.b16 %v397, %v395
    %v520 = vpack.c.b16 %v400, %v398
    %v521 = vpack.c.b16 %v401, %v399
    %v522 = vpack.c.b16 %v404, %v402
    %v523 = vpack.c.b16 %v405, %v403
    %v524 = vpack.c.b16 %v408, %v406
    %v525 = vpack.c.b16 %v409, %v407
    %v526 = vpack.c.b16 %v412, %v410
    %v527 = vpack.c.b16 %v413, %v411
    %v528 = vpack.c.b16 %v416, %v414
    %v529 = vpack.c.b16 %v417, %v415
    %v530 = vpack.c.b16 %v420, %v418
    %v531 = vpack.c.b16 %v421, %v419
    %v532 = vpack.c.b16 %v424, %v422
    %v533 = vpack.c.b16 %v425, %v423
    %v534 = vpack.c.b16 %v428, %v426
    %v535 = vpack.c.b16 %v429, %v427
    %v536 = vpack.c.b16 %v432, %v430
    %v537 = vpack.c.b16 %v433, %v431
    %v538 = vpack.c.b16 %v436, %v434
    %v539 = vpack.c.b16 %v437, %v435
    %v540 = vpack.c.b16 %v440, %v438
    %v541 = vpack.c.b16 %v441, %v439
    %v542 = vpack.c.b16 %v444, %v442
    %v543 = vpack.c.b16 %v445, %v443
    %vm642 = vcmask 130048
    %v644 = vsel %vm642, %v41, 0
    %646 = vmatprep.subr.bf16.mxu0 %v461
    %647 = vmatpush1.bf16.msra.mxu0 %v460
    %648 = vmatprep.subr.bf16.mxu0 %v459
    %649 = vmatpush1.bf16.msra.mxu0 %v458
    %650 = vmatprep.subr.bf16.mxu0 %v457
    %651 = vmatpush1.bf16.msra.mxu0 %v456
    %652 = vmatprep.subr.bf16.mxu0 %v455
    %653 = vmatpush1.bf16.msra.mxu0 %v454
    %654 = vmatprep.subr.bf16.mxu0 %v453
    %655 = vmatpush1.bf16.msra.mxu0 %v452
    %656 = vmatprep.subr.bf16.mxu0 %v451
    %657 = vmatpush1.bf16.msra.mxu0 %v450
    %658 = vmatprep.subr.bf16.mxu0 %v449
    %659 = vmatpush1.bf16.msra.mxu0 %v448
    %660 = vmatprep.subr.bf16.mxu0 %v447
    %661 = vmatpush1.bf16.msra.mxu0 %v446
    %662 = vmatprep.subr.bf16.mxu0 %v477
    %663 = vmatpush2.bf16.msra.mxu0 %v476
    %664 = vmatprep.subr.bf16.mxu0 %v475
    %665 = vmatpush2.bf16.msra.mxu0 %v474
    %666 = vmatprep.subr.bf16.mxu0 %v473
    %667 = vmatpush2.bf16.msra.mxu0 %v472
    %668 = vmatprep.subr.bf16.mxu0 %v471
    %669 = vmatpush2.bf16.msra.mxu0 %v470
    %670 = vmatprep.subr.bf16.mxu0 %v469
    %671 = vmatpush2.bf16.msra.mxu0 %v468
    %672 = vmatprep.subr.bf16.mxu0 %v467
    %673 = vmatpush2.bf16.msra.mxu0 %v466
    %674 = vmatprep.subr.bf16.mxu0 %v465
    %675 = vmatpush2.bf16.msra.mxu0 %v464
    %676 = vmatprep.subr.bf16.mxu0 %v463
    %677 = vmatpush2.bf16.msra.mxu0 %v462
    %678 = vmatprep.mubr.bf16.mxu0 %v36
    %679 = vmatmul.mubr.bf16.gmra.mxu0 %v35
    %v680 = vpop.f32.mrf.mxu0
    %v681 = vadd.f32 %v145, %v680
    %v682 = vpop.f32.mrf.mxu0
    %v683 = vadd.f32 %v149, %v682
    %v684 = vpop.f32.mrf.mxu0
    %v685 = vpop.f32.mrf.mxu0
    %686 = vdwg.mxu0
    %687 = vmatprep.subr.bf16.mxu0 %v493
    %688 = vmatpush1.bf16.msra.mxu0 %v492
    %689 = vmatprep.subr.bf16.mxu0 %v491
    %690 = vmatpush1.bf16.msra.mxu0 %v490
    %691 = vmatprep.subr.bf16.mxu0 %v489
    %692 = vmatpush1.bf16.msra.mxu0 %v488
    %693 = vmatprep.subr.bf16.mxu0 %v487
    %694 = vmatpush1.bf16.msra.mxu0 %v486
    %695 = vmatprep.subr.bf16.mxu0 %v485
    %696 = vmatpush1.bf16.msra.mxu0 %v484
    %697 = vmatprep.subr.bf16.mxu0 %v483
    %698 = vmatpush1.bf16.msra.mxu0 %v482
    %699 = vmatprep.subr.bf16.mxu0 %v481
    %700 = vmatpush1.bf16.msra.mxu0 %v480
    %701 = vmatprep.subr.bf16.mxu0 %v479
    %702 = vmatpush1.bf16.msra.mxu0 %v478
    %703 = vmatprep.subr.bf16.mxu0 %v509
    %704 = vmatpush2.bf16.msra.mxu0 %v508
    %705 = vmatprep.subr.bf16.mxu0 %v507
    %706 = vmatpush2.bf16.msra.mxu0 %v506
    %707 = vmatprep.subr.bf16.mxu0 %v505
    %708 = vmatpush2.bf16.msra.mxu0 %v504
    %709 = vmatprep.subr.bf16.mxu0 %v503
    %710 = vmatpush2.bf16.msra.mxu0 %v502
    %711 = vmatprep.subr.bf16.mxu0 %v501
    %712 = vmatpush2.bf16.msra.mxu0 %v500
    %713 = vmatprep.subr.bf16.mxu0 %v499
    %714 = vmatpush2.bf16.msra.mxu0 %v498
    %715 = vmatprep.subr.bf16.mxu0 %v497
    %716 = vmatpush2.bf16.msra.mxu0 %v496
    %717 = vmatprep.subr.bf16.mxu0 %v495
    %718 = vmatpush2.bf16.msra.mxu0 %v494
    %719 = vmatprep.mubr.bf16.mxu0 %v38
    %720 = vmatmul.mubr.bf16.gmra.mxu0 %v37
    %v721 = vpop.f32.mrf.mxu0
    %v722 = vadd.f32 %v681, %v721
    %v723 = vpop.f32.mrf.mxu0
    %v724 = vadd.f32 %v683, %v723
    %v725 = vpop.f32.mrf.mxu0
    %v726 = vpop.f32.mrf.mxu0
    %727 = vdwg.mxu0
    %728 = vmatprep.subr.bf16.mxu0 %v525
    %729 = vmatpush1.bf16.msra.mxu0 %v524
    %730 = vmatprep.subr.bf16.mxu0 %v523
    %731 = vmatpush1.bf16.msra.mxu0 %v522
    %732 = vmatprep.subr.bf16.mxu0 %v521
    %733 = vmatpush1.bf16.msra.mxu0 %v520
    %734 = vmatprep.subr.bf16.mxu0 %v519
    %735 = vmatpush1.bf16.msra.mxu0 %v518
    %736 = vmatprep.subr.bf16.mxu0 %v517
    %737 = vmatpush1.bf16.msra.mxu0 %v516
    %738 = vmatprep.subr.bf16.mxu0 %v515
    %739 = vmatpush1.bf16.msra.mxu0 %v514
    %740 = vmatprep.subr.bf16.mxu0 %v513
    %741 = vmatpush1.bf16.msra.mxu0 %v512
    %742 = vmatprep.subr.bf16.mxu0 %v511
    %743 = vmatpush1.bf16.msra.mxu0 %v510
    %744 = vmatprep.subr.bf16.mxu0 %v541
    %745 = vmatpush2.bf16.msra.mxu0 %v540
    %746 = vmatprep.subr.bf16.mxu0 %v539
    %747 = vmatpush2.bf16.msra.mxu0 %v538
    %748 = vmatprep.subr.bf16.mxu0 %v537
    %749 = vmatpush2.bf16.msra.mxu0 %v536
    %750 = vmatprep.subr.bf16.mxu0 %v535
    %751 = vmatpush2.bf16.msra.mxu0 %v534
    %752 = vmatprep.subr.bf16.mxu0 %v533
    %753 = vmatpush2.bf16.msra.mxu0 %v532
    %754 = vmatprep.subr.bf16.mxu0 %v531
    %755 = vmatpush2.bf16.msra.mxu0 %v530
    %756 = vmatprep.subr.bf16.mxu0 %v529
    %757 = vmatpush2.bf16.msra.mxu0 %v528
    %758 = vmatprep.subr.bf16.mxu0 %v527
    %759 = vmatpush2.bf16.msra.mxu0 %v526
    %760 = vmatprep.mubr.bf16.mxu0 %v40
    %761 = vmatmul.mubr.bf16.gmra.mxu0 %v39
    %v762 = vpop.f32.mrf.mxu0
    %v763 = vadd.f32 %v722, %v762
    %v764 = vpop.f32.mrf.mxu0
    %v765 = vadd.f32 %v724, %v764
    %v766 = vpop.f32.mrf.mxu0
    %v767 = vpop.f32.mrf.mxu0
    %768 = vdwg.mxu0
    %769 = vmatprep.subr.bf16.mxu0 0
    %770 = vmatpush1.bf16.msra.mxu0 0
    %771 = vmatprep.subr.bf16.mxu0 0
    %772 = vmatpush1.bf16.msra.mxu0 0
    %773 = vmatprep.subr.bf16.mxu0 0
    %774 = vmatpush1.bf16.msra.mxu0 0
    %775 = vmatprep.subr.bf16.mxu0 0
    %776 = vmatpush1.bf16.msra.mxu0 0
    %777 = vmatprep.subr.bf16.mxu0 0
    %778 = vmatpush1.bf16.msra.mxu0 0
    %779 = vmatprep.subr.bf16.mxu0 0
    %780 = vmatpush1.bf16.msra.mxu0 0
    %781 = vmatprep.subr.bf16.mxu0 0
    %782 = vmatpush1.bf16.msra.mxu0 0
    %783 = vmatprep.subr.bf16.mxu0 %v543
    %784 = vmatpush1.bf16.msra.mxu0 %v542
    %785 = vmatprep.subr.bf16.mxu0 0
    %786 = vmatpush2.bf16.msra.mxu0 0
    %787 = vmatprep.subr.bf16.mxu0 0
    %788 = vmatpush2.bf16.msra.mxu0 0
    %789 = vmatprep.subr.bf16.mxu0 0
    %790 = vmatpush2.bf16.msra.mxu0 0
    %791 = vmatprep.subr.bf16.mxu0 0
    %792 = vmatpush2.bf16.msra.mxu0 0
    %793 = vmatprep.subr.bf16.mxu0 0
    %794 = vmatpush2.bf16.msra.mxu0 0
    %795 = vmatprep.subr.bf16.mxu0 0
    %796 = vmatpush2.bf16.msra.mxu0 0
    %797 = vmatprep.subr.bf16.mxu0 0
    %798 = vmatpush2.bf16.msra.mxu0 0
    %799 = vmatprep.subr.bf16.mxu0 0
    %800 = vmatpush2.bf16.msra.mxu0 0
    %801 = vmatprep.mubr.bf16.mxu0 0
    %802 = vmatmul.mubr.bf16.gmra.mxu0 %v644
    %v803 = vpop.f32.mrf.mxu0
    %v804 = vadd.f32 %v763, %v803
    %v805 = vpop.f32.mrf.mxu0
    %v806 = vadd.f32 %v765, %v805
    %v807 = vpop.f32.mrf.mxu0
    %v808 = vpop.f32.mrf.mxu0
    %809 = vdwg.mxu0
    %v810 = vmax.f32 %v804, 0.0
    %v811 = vmax.f32 %v806, 0.0
    %v812 = vpack.c.bf16 %v810, %v810
    %v813 = vpack.c.bf16 %v811, %v811
    %v814 = vld [vmem:[%s3] sm:$0xf]
    %v815 = vld [vmem:[%s3 + $0x4] sm:$0xf]
    %v816 = vld [vmem:[%s3 + $0x8] sm:$0xf]
    %v817 = vld [vmem:[%s3 + $0xc] sm:$0xf]
    %v818 = vld [vmem:[%s3 + $0x10] sm:$0xf]
    %v819 = vld [vmem:[%s3 + $0x14] sm:$0xf]
    %v820 = vld [vmem:[%s3 + $0x18] sm:$0xf]
    %v821 = vld [vmem:[%s3 + $0x1c] sm:$0xf]
    %v822 = vld [vmem:[%s3 + $0x20] sm:$0xf]
    %v823 = vld [vmem:[%s3 + $0x24] sm:$0xf]
    %v824 = vld [vmem:[%s3 + $0x28] sm:$0xf]
    %v825 = vld [vmem:[%s3 + $0x2c] sm:$0xf]
    %v826 = vld [vmem:[%s3 + $0x30] sm:$0xf]
    %v827 = vld [vmem:[%s3 + $0x34] sm:$0xf]
    %v828 = vld [vmem:[%s3 + $0x38] sm:$0xf]
    %v829 = vld [vmem:[%s3 + $0x3c] sm:$0xf]
    %v830 = vld [vmem:[%s3 + $0x40] sm:$0xf]
    %v831 = vld [vmem:[%s3 + $0x44] sm:$0xf]
    %v832 = vld [vmem:[%s3 + $0x48] sm:$0xf]
    %v833 = vld [vmem:[%s3 + $0x4c] sm:$0xf]
    %v834 = vld [vmem:[%s3 + $0x50] sm:$0xf]
    %v835 = vld [vmem:[%s3 + $0x54] sm:$0xf]
    %v836 = vld [vmem:[%s3 + $0x58] sm:$0xf]
    %v837 = vld [vmem:[%s3 + $0x5c] sm:$0xf]
    %v838 = vld [vmem:[%s3 + $0x60] sm:$0xf]
    %v839 = vld [vmem:[%s4] sm:$0x1]
    %v841 = vlaneseq
    %v842 = vshrl.u32 %v841, 7
    %v843 = vsub.s32 0, %v842
    %v844 = vrot.slane %v839, %v843
    %v871 = vunpack.c.l.b16 %v814
    %v872 = vunpack.c.l.b16 %v815
    %v873 = vunpack.c.l.b16 %v816
    %v874 = vunpack.c.l.b16 %v817
    %v875 = vunpack.c.l.b16 %v818
    %v876 = vunpack.c.l.b16 %v819
    %v877 = vunpack.c.l.b16 %v820
    %v878 = vunpack.c.l.b16 %v821
    %v879 = vunpack.c.l.b16 %v822
    %v880 = vunpack.c.l.b16 %v823
    %v881 = vunpack.c.l.b16 %v824
    %v882 = vunpack.c.l.b16 %v825
    %v883 = vunpack.c.l.b16 %v826
    %v884 = vunpack.c.l.b16 %v827
    %v885 = vunpack.c.l.b16 %v828
    %v886 = vunpack.c.l.b16 %v829
    %v887 = vunpack.c.l.b16 %v830
    %v888 = vunpack.c.l.b16 %v831
    %v889 = vunpack.c.l.b16 %v832
    %v890 = vunpack.c.l.b16 %v833
    %v891 = vunpack.c.l.b16 %v834
    %v892 = vunpack.c.l.b16 %v835
    %v893 = vunpack.c.l.b16 %v836
    %v894 = vunpack.c.l.b16 %v837
    %v895 = vunpack.c.l.b16 %v838
    %v896 = vpack.c.b16 %v872, %v871
    %v897 = vpack.c.b16 %v874, %v873
    %v898 = vpack.c.b16 %v876, %v875
    %v899 = vpack.c.b16 %v878, %v877
    %v900 = vpack.c.b16 %v880, %v879
    %v901 = vpack.c.b16 %v882, %v881
    %v902 = vpack.c.b16 %v884, %v883
    %v903 = vpack.c.b16 %v886, %v885
    %v904 = vpack.c.b16 %v888, %v887
    %v905 = vpack.c.b16 %v890, %v889
    %v906 = vpack.c.b16 %v892, %v891
    %v907 = vpack.c.b16 %v894, %v893
    %v908 = vpack.c.b16 %v895, %v895
    %vm921 = vcmask 588800
    %v923 = vsel %vm921, %v813, 0
    %vm925 = vcmask 1043456
    %v927 = vsel %vm925, %v908, 0
    %929 = vmatprep.subr.bf16.mxu0 0
    %930 = vmatpush1.bf16.msra.mxu0 %v903
    %931 = vmatprep.subr.bf16.mxu0 0
    %932 = vmatpush1.bf16.msra.mxu0 %v902
    %933 = vmatprep.subr.bf16.mxu0 0
    %934 = vmatpush1.bf16.msra.mxu0 %v901
    %935 = vmatprep.subr.bf16.mxu0 0
    %936 = vmatpush1.bf16.msra.mxu0 %v900
    %937 = vmatprep.subr.bf16.mxu0 0
    %938 = vmatpush1.bf16.msra.mxu0 %v899
    %939 = vmatprep.subr.bf16.mxu0 0
    %940 = vmatpush1.bf16.msra.mxu0 %v898
    %941 = vmatprep.subr.bf16.mxu0 0
    %942 = vmatpush1.bf16.msra.mxu0 %v897
    %943 = vmatprep.subr.bf16.mxu0 0
    %944 = vmatpush1.bf16.msra.mxu0 %v896
    %945 = vmatprep.subr.bf16.mxu0 0
    %946 = vmatpush2.bf16.msra.mxu0 0
    %947 = vmatprep.subr.bf16.mxu0 0
    %948 = vmatpush2.bf16.msra.mxu0 0
    %949 = vmatprep.subr.bf16.mxu0 0
    %950 = vmatpush2.bf16.msra.mxu0 0
    %951 = vmatprep.subr.bf16.mxu0 0
    %952 = vmatpush2.bf16.msra.mxu0 %v927
    %953 = vmatprep.subr.bf16.mxu0 0
    %954 = vmatpush2.bf16.msra.mxu0 %v907
    %955 = vmatprep.subr.bf16.mxu0 0
    %956 = vmatpush2.bf16.msra.mxu0 %v906
    %957 = vmatprep.subr.bf16.mxu0 0
    %958 = vmatpush2.bf16.msra.mxu0 %v905
    %959 = vmatprep.subr.bf16.mxu0 0
    %960 = vmatpush2.bf16.msra.mxu0 %v904
    %961 = vmatprep.mubr.bf16.mxu0 %v923
    %962 = vmatmul.mubr.bf16.gmra.mxu0 %v812
    %v963 = vpop.f32.mrf.mxu0
    %v964 = vadd.f32 %v844, %v963
    %v965 = vpop.f32.mrf.mxu0
    %v966 = vpop.f32.mrf.mxu0
    %v967 = vpop.f32.mrf.mxu0
    %968 = vdwg.mxu0
    %v969 = vmax.f32 %v964, 0.0
    %v970 = vpack.c.bf16 %v969, %v969
    %v971 = vld [vmem:[%s5] sm:$0xf]
    %v972 = vld [vmem:[%s5 + $0x4] sm:$0xf]
    %v973 = vld [vmem:[%s5 + $0x8] sm:$0xf]
    %v974 = vld [vmem:[%s5 + $0xc] sm:$0xf]
    %v975 = vld [vmem:[%s5 + $0x10] sm:$0xf]
    %v976 = vld [vmem:[%s5 + $0x14] sm:$0xf]
    %v977 = vld [vmem:[%s5 + $0x18] sm:$0x1]
    %v978 = vld [vmem:[%s6] sm:$0x1]
    %v980 = vlaneseq
    %v981 = vshrl.u32 %v980, 7
    %v982 = vsub.s32 0, %v981
    %v983 = vrot.slane %v978, %v982
    %v992 = vunpack.c.l.b16 %v971
    %v993 = vunpack.c.l.b16 %v972
    %v994 = vunpack.c.l.b16 %v973
    %v995 = vunpack.c.l.b16 %v974
    %v996 = vunpack.c.l.b16 %v975
    %v997 = vunpack.c.l.b16 %v976
    %v998 = vunpack.c.l.b16 %v977
    %v999 = vpack.c.b16 %v993, %v992
    %v1000 = vpack.c.b16 %v995, %v994
    %v1001 = vpack.c.b16 %v997, %v996
    %v1002 = vpack.c.b16 %v998, %v998
    %vm1006 = vcmask 408576
    %v1008 = vsel %vm1006, %v970, 0
    %vm1010 = vcmask 1040384
    %v1012 = vsel %vm1010, %v1002, 0
    %1014 = vmatprep.subr.bf16.mxu0 0
    %1015 = vmatpush1.bf16.msra.mxu0 0
    %1016 = vmatprep.subr.bf16.mxu0 0
    %1017 = vmatpush1.bf16.msra.mxu0 0
    %1018 = vmatprep.subr.bf16.mxu0 0
    %1019 = vmatpush1.bf16.msra.mxu0 0
    %1020 = vmatprep.subr.bf16.mxu0 0
    %1021 = vmatpush1.bf16.msra.mxu0 0
    %1022 = vmatprep.subr.bf16.mxu0 0
    %1023 = vmatpush1.bf16.msra.mxu0 %v1012
    %1024 = vmatprep.subr.bf16.mxu0 0
    %1025 = vmatpush1.bf16.msra.mxu0 %v1001
    %1026 = vmatprep.subr.bf16.mxu0 0
    %1027 = vmatpush1.bf16.msra.mxu0 %v1000
    %1028 = vmatprep.subr.bf16.mxu0 0
    %1029 = vmatpush1.bf16.msra.mxu0 %v999
    %1030 = vmatprep.subr.bf16.mxu0 0
    %1031 = vmatpush2.bf16.msra.mxu0 0
    %1032 = vmatprep.subr.bf16.mxu0 0
    %1033 = vmatpush2.bf16.msra.mxu0 0
    %1034 = vmatprep.subr.bf16.mxu0 0
    %1035 = vmatpush2.bf16.msra.mxu0 0
    %1036 = vmatprep.subr.bf16.mxu0 0
    %1037 = vmatpush2.bf16.msra.mxu0 0
    %1038 = vmatprep.subr.bf16.mxu0 0
    %1039 = vmatpush2.bf16.msra.mxu0 0
    %1040 = vmatprep.subr.bf16.mxu0 0
    %1041 = vmatpush2.bf16.msra.mxu0 0
    %1042 = vmatprep.subr.bf16.mxu0 0
    %1043 = vmatpush2.bf16.msra.mxu0 0
    %1044 = vmatprep.subr.bf16.mxu0 0
    %1045 = vmatpush2.bf16.msra.mxu0 0
    %1046 = vmatprep.mubr.bf16.mxu0 0
    %1047 = vmatmul.mubr.bf16.gmra.mxu0 %v1008
    %v1048 = vpop.f32.mrf.mxu0
    %v1049 = vadd.f32 %v983, %v1048
    %v1050 = vpop.f32.mrf.mxu0
    %v1051 = vpop.f32.mrf.mxu0
    %v1052 = vpop.f32.mrf.mxu0
    %1053 = vdwg.mxu0
    %1054 = vmax.xlane.f32.xlu0 %v1049
    %v1055 = vpop.xlane.xlu0 %1054
    %v1056 = vsub.f32 %v1049, %v1055
    %v1057 = vmul.f32 %v1056, 1.442695
    %v1058 = vpow.pop %v1057
    %1059 = vadd.xlane.f32.xlu0 %v1058
    %v1060 = vpop.xlane.xlu0 %1059
    %v1061 = vlog2.pop %v1060
    %v1062 = vmul.f32 %v1061, 0.6931472
    %v1063 = vsub.f32 %v1056, %v1062
    %1064 = vst [vmem:[#allocation2] sm:$0xff] %v1063
    // Predicated region
    $region30: #{t_model_forward.1} parent=1 // pred_check
      _
    $region31: #{t_model_forward.1} parent=1 // pred_check_branch
      %1066 = sbr.rel (0) target = $region33
    $region32: #{t_model_forward.1} parent=1 // pred_region
      %s1068 = ssub.s32 128, 128
      %1069 = vsyncadd [#allocation3], %s1068
      %s1071 = sshll.u32 [#allocation2], 4
      %s1072 = int_to_ptr.vmem [resolvable:$true] %s1071
      %1074 = dma.vmem_to_hbm [thread:$0]  %s1072, 128, %s7, [#allocation3]
    $region33: #{t_model_forward.1} parent=1 // pred_fallthru
      _
    // Predicated region
    $region34: #{t_model_forward.1} parent=1 // pred_check
      _
    $region35: #{t_model_forward.1} parent=1 // pred_check_branch
      %1076 = sbr.rel (0) target = $region37
    $region36: #{t_model_forward.1} parent=1 // pred_region
      %1077 = dma.done [#allocation3], 128
    $region37: #{t_model_forward.1} parent=1 // pred_fallthru
      _
    %1078 = vsyncpa [#allocation3], 1

</llo_original>
